<compile_context>
chip_gen: v7x
topology: tpu7x:2x2x1
jax: 0.10.0
libtpu: 0.0.40
codegen_flags: <defaults>
</compile_context>

<pallas_src>
import functools

import jax
import jax.numpy as jnp
from jax.experimental import pallas as pl
from jax.experimental.pallas import tpu as pltpu


def _round_up(n, m):
    return ((n + m - 1) // m) * m


def critic_head_kernel(x_ref, w_ref, b_ref, o_ref, acc_ref, *, tk, nk):
    """One (batch-tile i, k-step) of y = x @ w.T + b as a VPU mul-accumulate.

    x_ref:   (tb, tk)    activation tile (pipelined over the grid)
    w_ref:   (1, tk)     lane-dense weight chunk
    b_ref:   (1, 1)      scalar bias in SMEM
    o_ref:   (1, 1, tb)  lane-dense output row for this batch tile
    acc_ref: (tb, 128)   f32 lane-partial accumulator (carried across k)
    """
    k = pl.program_id(1)
    tb = x_ref.shape[0]
    w = w_ref[...].astype(jnp.float32)           # (1, tk), loaded once per step

    if tk % 128 == 0:
        # Lane-aligned path: VPU multiply-accumulate into (tb, 128) lane
        # partials; one cross-lane (XLU) reduce only at the last k step.
        if nk > 1:
            @pl.when(k == 0)
            def _():
                acc_ref[...] = jnp.zeros_like(acc_ref)

            acc = acc_ref[...]
        else:
            acc = jnp.zeros((tb, 128), jnp.float32)

        for c in range(0, tk, 128):              # static 128-lane chunks (VPU only)
            acc = acc + x_ref[:, c:c + 128].astype(jnp.float32) * w[:, c:c + 128]

        def _emit():
            row = acc.sum(axis=-1) + b_ref[0, 0]   # (tb,) single XLU reduce + bias
            o_ref[...] = row[None, None, :].astype(o_ref.dtype)

        if nk > 1:
            acc_ref[...] = acc
            pl.when(k == nk - 1)(_emit)
        else:
            _emit()
    else:
        # D not a multiple of 128 (small / odd feature dims) => single k step.
        # Chunk the product so f32 temporaries stay bounded.
        row = jnp.zeros((tb,), jnp.float32)
        for c in range(0, tk, 512):
            cw = min(512, tk - c)
            row = row + (x_ref[:, c:c + cw].astype(jnp.float32)
                         * w[:, c:c + cw]).sum(axis=-1)
        o_ref[...] = (row + b_ref[0, 0])[None, None, :].astype(o_ref.dtype)


def critic_head(x, weight, bias, *, max_tb=2048, x_tile_budget_bytes=16 << 20,
                out_dtype=jnp.float32):
    """Forward of CriticHead: y = x @ weight.T + bias.

    x:      (..., D) activations (f32 or bf16)
    weight: (1, D) (PyTorch nn.Linear orientation), (D, 1) or (D,)
    bias:   scalar / (1,) / (1, 1)
    Returns (..., 1) in `out_dtype` (f32 by default, preserving the f32
    accumulator even for bf16 inputs).
    """
    *lead, D = x.shape
    xb = x.reshape(-1, D)
    B = xb.shape[0]
    itemsize = jnp.dtype(xb.dtype).itemsize
    pack = 8 * max(1, 4 // itemsize)       # sublane pack: 8 f32 / 16 bf16 / 32 int8

    w_row = jnp.asarray(weight).reshape(1, D).astype(xb.dtype)   # lane-dense row
    bias_smem = jnp.asarray(bias, dtype=jnp.float32).reshape(1, 1)

    # ---- K (reduction) tiling: split only for large, 128-aligned D. ----
    if D % 128 == 0 and D > 4096:
        tk = 2048
        while D % tk:
            tk //= 2                        # terminates at 128 since D % 128 == 0
    else:
        tk = D
    nk = D // tk

    # ---- Batch tiling. ----
    if B <= pack:
        tb = B                              # block == full dim: always legal
    else:
        # Largest pack-multiple whose double-buffered x tile fits the budget
        # (keeps the full working set well inside 32 MiB scoped VMEM on v7x).
        tb_cap = (x_tile_budget_bytes // (2 * tk * itemsize)) // pack * pack
        tb = max(pack, min(max_tb, tb_cap))
        # Guarantee >= 2 batch tiles so the "parallel" axis can shard across
        # v7x's two TensorCores (no-op on single-core v5e/v6e).
        tb = min(tb, max(pack, _round_up((B + 1) // 2, pack)))
    nb = pl.cdiv(B, tb)                     # ragged last tile; no jnp.pad copy of x

    kernel = functools.partial(critic_head_kernel, tk=tk, nk=nk)

    out = pl.pallas_call(
        kernel,
        out_shape=jax.ShapeDtypeStruct((nb, 1, tb), out_dtype),
        grid=(nb, nk),
        in_specs=[
            pl.BlockSpec((tb, tk), lambda i, k: (i, k)),          # x tile
            pl.BlockSpec((1, tk), lambda i, k: (0, k)),           # weight chunk
            pl.BlockSpec(memory_space=pltpu.MemorySpace.SMEM),    # scalar bias
        ],
        out_specs=pl.BlockSpec((1, 1, tb), lambda i, k: (i, 0, 0)),  # lane-dense out
        scratch_shapes=[pltpu.VMEM((tb, 128), jnp.float32)],         # lane partials
        compiler_params=pltpu.CompilerParams(
            dimension_semantics=("parallel", "arbitrary"),
            vmem_limit_bytes=32 << 20,
        ),
        cost_estimate=pl.CostEstimate(
            flops=2 * B * D,
            transcendentals=0,
            bytes_accessed=B * D * itemsize + D * itemsize
            + B * jnp.dtype(out_dtype).itemsize,
        ),
    )(xb, w_row, bias_smem)

    return out.reshape(nb * tb)[:B].reshape(*lead, 1)


def init_critic_head_params(key, input_size, dtype=jnp.float32):
    """Synthetic init matching nn.init.orthogonal_ on a (1, input_size) weight
    (a unit-norm row, up to sign) and constant-0 bias.
    # TODO(synk): exact orthogonal_ (QR-based) init is host-side setup, not a kernel.
    """
    w = jax.random.normal(key, (1, input_size), dtype=jnp.float32)
    w = w / jnp.linalg.norm(w)
    return w.astype(dtype), jnp.zeros((1,), dtype=dtype)


if __name__ == "__main__":
    key = jax.random.PRNGKey(0)
    k_x, k_w, k_x2, k_w2, k_x3, k_w3 = jax.random.split(key, 6)

    def ref_forward(x, weight, bias):
        # Pure-JAX reference of nn.Linear(D, 1): x @ W.T + b (VPU math, f32).
        return jnp.sum(x * weight.reshape(1, -1), axis=-1, keepdims=True) \
            + jnp.asarray(bias, jnp.float32).reshape(1, 1)

    # 1) Small demo shape (unaligned-D path).
    batch, input_size = 2, 32
    x = jax.random.normal(k_x, (batch, input_size), dtype=jnp.float32)
    weight, bias = init_critic_head_params(k_w, input_size)
    out = jax.block_until_ready(critic_head(x, weight, bias))
    assert out.shape == (batch, 1)
    assert jnp.allclose(out, ref_forward(x, weight, bias), atol=1e-5, rtol=1e-5)

    # 2) Lane-aligned D, ragged final batch tile, non-zero bias.
    x2 = jax.random.normal(k_x2, (100, 256), dtype=jnp.float32)
    w2, _ = init_critic_head_params(k_w2, 256)
    b2 = jnp.full((1,), 0.37, dtype=jnp.float32)
    out2 = jax.block_until_ready(critic_head(x2, w2, b2))
    assert jnp.allclose(out2, ref_forward(x2, w2, b2), atol=1e-4, rtol=1e-4)

    # 3) Multi-step K reduction (D > 4096) — exercises the accumulator carry.
    x3 = jax.random.normal(k_x3, (64, 8192), dtype=jnp.float32)
    w3, b3 = init_critic_head_params(k_w3, 8192)
    out3 = jax.block_until_ready(critic_head(x3, w3, b3))
    assert jnp.allclose(out3, ref_forward(x3, w3, b3), atol=1e-4, rtol=1e-4)

    print("KERNEL_OK")
</pallas_src>

<mosaic_0001>
module attributes {stable_mosaic.version = 11 : i64} {
  func.func @critic_head_kernel(%arg0: i32, %arg1: i32, %arg2: memref<2x32xf32, #tpu.memory_space<vmem>>, %arg3: memref<1x32xf32, #tpu.memory_space<vmem>>, %arg4: memref<1x1xf32, #tpu.memory_space<smem>>, %arg5: memref<1x1x2xf32, #tpu.memory_space<vmem>>, %arg6: memref<2x128xf32, #tpu.memory_space<vmem>>) attributes {dimension_semantics = [#tpu.dimension_semantics<parallel>, #tpu.dimension_semantics<arbitrary>], iteration_bounds = array<i64: 1, 1>, scalar_prefetch = 0 : i64, scratch_operands = 1 : i64, tpu.core_type = #tpu.core_type<tc>, window_params = [{transform_indices = @transform_0, window_bounds = array<i64: 2, 32>}, {transform_indices = @transform_1, window_bounds = array<i64: 1, 32>}, {transform_indices = @transform_2, window_bounds = array<i64: 1, 1>}, {transform_indices = @transform_3, window_bounds = array<i64: 1, 1, 2>}]} {
    %c0 = arith.constant 0 : index
    %c0_0 = arith.constant 0 : index
    %0 = vector.load %arg3[%c0, %c0_0] : memref<1x32xf32, #tpu.memory_space<vmem>>, vector<1x32xf32>
    %cst = arith.constant 0.000000e+00 : f32
    %1 = vector.broadcast %cst : f32 to vector<2xf32>
    %c0_1 = arith.constant 0 : index
    %c0_2 = arith.constant 0 : index
    %2 = vector.load %arg2[%c0_1, %c0_2] : memref<2x32xf32, #tpu.memory_space<vmem>>, vector<2x32xf32>
    %3 = vector.broadcast %0 : vector<1x32xf32> to vector<2x32xf32>
    %4 = arith.mulf %2, %3 : vector<2x32xf32>
    %cst_3 = arith.constant dense<0.000000e+00> : vector<2xf32>
    %5 = vector.multi_reduction <add>, %4, %cst_3 [1] : vector<2x32xf32> to vector<2xf32>
    %6 = arith.addf %1, %5 : vector<2xf32>
    %c0_4 = arith.constant 0 : index
    %c0_5 = arith.constant 0 : index
    %7 = memref.load %arg4[%c0_4, %c0_5] : memref<1x1xf32, #tpu.memory_space<smem>>
    %8 = vector.broadcast %7 : f32 to vector<2xf32>
    %9 = arith.addf %6, %8 : vector<2xf32>
    %10 = vector.shape_cast %9 : vector<2xf32> to vector<1x1x2xf32>
    %c0_6 = arith.constant 0 : index
    %c0_7 = arith.constant 0 : index
    %c0_8 = arith.constant 0 : index
    %11 = vector.load %arg5[%c0_6, %c0_7, %c0_8] : memref<1x1x2xf32, #tpu.memory_space<vmem>>, vector<1x1x2xf32>
    tpu.vector_store %arg5[%c0_6, %c0_7, %c0_8], %10 {strides = array<i32>} : memref<1x1x2xf32, #tpu.memory_space<vmem>>, vector<1x1x2xf32>,
    return
  }
  func.func @transform_0(%arg0: i32, %arg1: i32) -> (i32, i32) {
    %c0_i32 = arith.constant 0 : i32
    return %arg0, %arg1 : i32, i32
  }
  func.func @transform_1(%arg0: i32, %arg1: i32) -> (i32, i32) {
    %c0_i32 = arith.constant 0 : i32
    %c0_i32_0 = arith.constant 0 : i32
    return %c0_i32, %arg1 : i32, i32
  }
  func.func @transform_2(%arg0: i32, %arg1: i32) -> (i32, i32) {
    %c0_i32 = arith.constant 0 : i32
    %c0_i32_0 = arith.constant 0 : i32
    %c0_i32_1 = arith.constant 0 : i32
    return %c0_i32, %c0_i32_0 : i32, i32
  }
  func.func @transform_3(%arg0: i32, %arg1: i32) -> (i32, i32, i32) {
    %c0_i32 = arith.constant 0 : i32
    %c0_i32_0 = arith.constant 0 : i32
    %c0_i32_1 = arith.constant 0 : i32
    return %arg0, %c0_i32, %c0_i32_0 : i32, i32, i32
  }
}

</mosaic_0001>

<llo_original>
// kernel: tpu_custom_call.1
$region0: #{tpu_custom_call.1}
  #allocation0 [shape = 'u32[]', space=smem, size = 0x4, offset = 0x4, fixed_abs, tag = 'smem constant byte address 0x4 - core index']
  #allocation1 [shape = 'u32[144,128]{1,0:T(1,128)}', space=vmem, size = 0x12000, scoped, tag = 'internal scratch']
  #allocation2 [shape = 'f32[2,128]{1,0:T(2,128)}', space=vmem, size = 0x400, scoped, tag = 'scratch operand']
  #allocation3 [shape = 'f32[1,1]{1,0:T(1,128)S(6)}', space=smem, size = 0x200, scoped, tag = 'scoped memory for tpu_custom_call.1']
  %s0 = inlined_call_operand.vmem [shape: f32[2,32], index: 0, kind: input, shape index: {}]
  %s1 = inlined_call_operand.vmem [shape: f32[1,32], index: 1, kind: input, shape index: {}]
  %s2 = inlined_call_operand.<no memory space> [shape: f32[1,1], index: 2, kind: input, shape index: {}]
  %s3 = inlined_call_operand.hbm [shape: f32[1,1,2], index: 3, kind: output, shape index: {}]
  %s4 = sld [smem:[#allocation0]]
  $region22: #{tpu_custom_call.1} parent=0
    _
  %s6 = ssub.s32 1, %s4
  %s7 = scalar_select 0, %s6, %s4
  %8 = sst [smem:[#allocation3]] %s2
  $region1: #{tpu_custom_call.1} parent=0
    #allocation4 [shape = 'u8[512]{0}', space=vmem, size = 0x400, scoped, tag = 'output window, operand 0, single buffered']
    #allocation5 [shape = 's32[1]{0}', space=sflag, size = 0x4, scoped, tag = 'scoped memory for tpu_custom_call.1']
    %9 = vsyncpa [#allocation5], 0
    // Predicated region
    $region2: #{tpu_custom_call.1} parent=1 // pred_check
      _
    $region3: #{tpu_custom_call.1} parent=1 // pred_check_branch
      %11 = sbr.rel (0) target = $region5
    $region4: #{tpu_custom_call.1} parent=1 // pred_region
      _
    $region5: #{tpu_custom_call.1} parent=1 // pred_fallthru
      _
    // Predicated region
    $region6: #{tpu_custom_call.1} parent=1 // pred_check
      _
    $region7: #{tpu_custom_call.1} parent=1 // pred_check_branch
      %13 = sbr.rel (0) target = $region9
    $region8: #{tpu_custom_call.1} parent=1 // pred_region
      _
    $region9: #{tpu_custom_call.1} parent=1 // pred_fallthru
      _
    // Predicated region
    $region10: #{tpu_custom_call.1} parent=1 // pred_check
      _
    $region11: #{tpu_custom_call.1} parent=1 // pred_check_branch
      %15 = sbr.rel (0) target = $region13
    $region12: #{tpu_custom_call.1} parent=1 // pred_region
      _
    $region13: #{tpu_custom_call.1} parent=1 // pred_fallthru
      _
    %v16 = vld [vmem:[%s1] sm:$0x1]
    %v17 = vld [vmem:[%s0] sm:$0x3]
    %v19 = vlaneseq
    %v20 = vshrl.u32 %v19, 7
    %v21 = vsub.s32 0, %v20
    %v22 = vrot.slane %v16, %v21
    %v24 = vmul.f32 %v17, %v22
    %vm25 = vcmask 254976
    %v26 = vsel %vm25, %v24, 0.0
    %27 = vadd.xlane.f32.xlu0 %v26
    %v28 = vpop.xlane.xlu0 %27
    %v29 = vadd.f32 %v28, 0.0
    %s30 = sld [smem:[#allocation3]]
    %v31 = vstv %s30
    %v32 = vadd.f32 %v29, %v31
    %v34 = vlaneseq
    %v35 = vand.u32 %v34, 127
    %v36 = vlaneseq
    %v37 = vshrl.u32 %v36, 7
    %v38 = vsub.s32 %v35, %v37
    %v39 = vrot.slane %v32, %v38
    %vm41 = vcmask 8192
    %42 = vst.msk [vmem:[#allocation4] sm:$0x1] %vm41, %v39
    // Predicated region
    $region14: #{tpu_custom_call.1} parent=1 // pred_check
      _
    $region15: #{tpu_custom_call.1} parent=1 // pred_check_branch
      %44 = sbr.rel (0) target = $region17
    $region16: #{tpu_custom_call.1} parent=1 // pred_region
      %s46 = ssub.s32 16, 16
      %47 = vsyncadd [#allocation5], %s46
      %s49 = sshll.u32 [#allocation4], 4
      %s50 = int_to_ptr.vmem [resolvable:$true] %s49
      %52 = dma.vmem_to_hbm [thread:$0]  %s50, 16, %s3, [#allocation5]
    $region17: #{tpu_custom_call.1} parent=1 // pred_fallthru
      _
    // Predicated region
    $region18: #{tpu_custom_call.1} parent=1 // pred_check
      _
    $region19: #{tpu_custom_call.1} parent=1 // pred_check_branch
      %54 = sbr.rel (0) target = $region21
    $region20: #{tpu_custom_call.1} parent=1 // pred_region
      %55 = dma.done [#allocation5], 16
    $region21: #{tpu_custom_call.1} parent=1 // pred_fallthru
      _
    %56 = vsyncpa [#allocation5], 1

</llo_original>
